<compile_context>
chip_gen: v7x
topology: tpu7x:2x2x1
jax: 0.10.0
libtpu: 0.0.40
codegen_flags: <defaults>
</compile_context>

<pallas_src>
import functools

import jax
import jax.numpy as jnp
from jax.experimental import pallas as pl
from jax.experimental.pallas import tpu as pltpu

INPUT_DIM = 200
LATENT_DIM = 20
# encoder dims then decoder dims
LAYER_DIMS = [INPUT_DIM, 128, 64, 32, LATENT_DIM, 32, 64, 128, INPUT_DIM]
# ReLU after every layer except the latent projection (idx 3) and the final output (idx 7)
RELU_AFTER = [True, True, True, False, True, True, True, False]
N_LAYERS = len(LAYER_DIMS) - 1

LANE = 128


def _round_up(n, m):
    return ((n + m - 1) // m) * m


# lane-dense (multiple-of-128) padded dims: [256, 128, 128, 128, 128, 128, 128, 128, 256]
PADDED_DIMS = [_round_up(d, LANE) for d in LAYER_DIMS]


def autoencoder_kernel(x_ref, *refs):
    """Fused 8-layer MLP forward on one batch tile.

    refs = (w0, b0, w1, b1, ..., w7, b7, out_ref); weights are bf16 [in_pad, out_pad]
    (PyTorch weight.T, zero-padded), biases are f32 [1, out_pad]. x_ref is bf16.
    """
    out_ref = refs[-1]
    params = refs[:-1]
    h = x_ref[...]  # bf16 [tile_b, 256]
    for i in range(N_LAYERS):
        w = params[2 * i][...]          # bf16 [in_pad, out_pad]
        b = params[2 * i + 1][...]      # f32  [1, out_pad]
        # bf16 x bf16 MXU matmul with f32 accumulation, f32 bias add
        h = jnp.dot(h.astype(jnp.bfloat16), w,
                    preferred_element_type=jnp.float32) + b
        if RELU_AFTER[i]:
            h = jnp.maximum(h, 0.0)
    out_ref[...] = h.astype(out_ref.dtype)


def pack_params(flat_params):
    """Zero-pad every layer to lane-dense shapes and cast weights to bf16."""
    packed = []
    for i in range(N_LAYERS):
        w, b = flat_params[2 * i], flat_params[2 * i + 1]
        in_d, out_d = LAYER_DIMS[i], LAYER_DIMS[i + 1]
        in_p, out_p = PADDED_DIMS[i], PADDED_DIMS[i + 1]
        w_p = jnp.zeros((in_p, out_p), jnp.bfloat16)
        w_p = w_p.at[:in_d, :out_d].set(w.astype(jnp.bfloat16))
        b_p = jnp.zeros((1, out_p), jnp.float32)
        b_p = b_p.at[:, :out_d].set(b.astype(jnp.float32))
        packed += [w_p, b_p]
    return packed


@functools.partial(jax.jit, static_argnames=("tile_b",))
def _autoencoder_padded(x_pad, packed_params, tile_b):
    B_pad = x_pad.shape[0]

    in_specs = [pl.BlockSpec((tile_b, PADDED_DIMS[0]), lambda i: (i, 0))]
    for p in packed_params:
        # whole (tiny, ~170 KB bf16) weight / bias set resident in VMEM across the grid
        in_specs.append(pl.BlockSpec(p.shape, lambda i: (0, 0)))

    out_spec = pl.BlockSpec((tile_b, PADDED_DIMS[-1]), lambda i: (i, 0))

    return pl.pallas_call(
        autoencoder_kernel,
        out_shape=jax.ShapeDtypeStruct((B_pad, PADDED_DIMS[-1]), jnp.float32),
        grid_spec=pltpu.PrefetchScalarGridSpec(
            num_scalar_prefetch=0,
            grid=(B_pad // tile_b,),
            in_specs=in_specs,
            out_specs=out_spec,
        ),
        compiler_params=pltpu.CompilerParams(
            # batch axis is embarrassingly parallel -> megacore / 2-TC sharding
            dimension_semantics=("parallel",),
        ),
    )(x_pad, *packed_params)


def autoencoder_forward(x, packed_params, tile_b=512):
    """x: [B, 200] -> [B, 200]. Handles ragged / small batches by zero-padding."""
    B, D = x.shape
    assert D == INPUT_DIM
    # clamp tile to the (16-rounded, bf16-sublane-friendly) batch so tiny batches
    # don't over-pad; large batches get >=256-row MXU-filling tiles.
    tile_b_eff = max(16, min(tile_b, _round_up(B, 16)))
    B_pad = _round_up(B, tile_b_eff)
    # single fused pad+cast in the wrapper; kernel then reads bf16 (half the bytes)
    x_pad = jnp.pad(x.astype(jnp.bfloat16),
                    ((0, B_pad - B), (0, PADDED_DIMS[0] - D)))
    out_pad = _autoencoder_padded(x_pad, packed_params, tile_b_eff)
    return out_pad[:B, :INPUT_DIM]


def init_params(key):
    """Deterministic init mimicking PyTorch Linear default (U(-1/sqrt(fan_in), ...))."""
    flat = []
    for i in range(N_LAYERS):
        fan_in, fan_out = LAYER_DIMS[i], LAYER_DIMS[i + 1]
        key, kw, kb = jax.random.split(key, 3)
        bound = 1.0 / jnp.sqrt(fan_in)
        # stored as [in, out] == PyTorch weight.T
        w = jax.random.uniform(kw, (fan_in, fan_out), jnp.float32, -bound, bound)
        b = jax.random.uniform(kb, (1, fan_out), jnp.float32, -bound, bound)
        flat += [w, b]
    return flat


def reference_forward(x, flat_params):
    h = x
    for i in range(N_LAYERS):
        w, b = flat_params[2 * i], flat_params[2 * i + 1]
        h = h @ w + b
        if RELU_AFTER[i]:
            h = jnp.maximum(h, 0.0)
    return h


if __name__ == "__main__":
    key = jax.random.PRNGKey(0)
    key, kx = jax.random.split(key)

    params = init_params(key)
    packed = pack_params(params)

    # small batch (also exercises the tile-clamp path)
    batch = 16
    x = jax.random.normal(kx, (batch, INPUT_DIM), jnp.float32)

    out = autoencoder_forward(x, packed)
    out = jax.block_until_ready(out)
    assert out.shape == (batch, INPUT_DIM)

    ref = reference_forward(x, params)
    # bf16 MXU operands (f32 accumulate) -> relaxed tolerance vs f32 reference
    assert jnp.allclose(out, ref, atol=2e-2, rtol=5e-2), "mismatch vs reference (small batch)"

    # ragged batch (not a multiple of 16) to exercise batch padding
    key, kx2 = jax.random.split(key)
    x2 = jax.random.normal(kx2, (50, INPUT_DIM), jnp.float32)
    out2 = jax.block_until_ready(autoencoder_forward(x2, packed))
    ref2 = reference_forward(x2, params)
    assert out2.shape == (50, INPUT_DIM)
    assert jnp.allclose(out2, ref2, atol=2e-2, rtol=5e-2), "mismatch vs reference (ragged batch)"

    print("KERNEL_OK")
</pallas_src>

<mosaic_0001>
module attributes {stable_mosaic.version = 11 : i64} {
  func.func @autoencoder_kernel(%arg0: i32, %arg1: memref<16x256xbf16, #tpu.memory_space<vmem>>, %arg2: memref<256x128xbf16, #tpu.memory_space<vmem>>, %arg3: memref<1x128xf32, #tpu.memory_space<vmem>>, %arg4: memref<128x128xbf16, #tpu.memory_space<vmem>>, %arg5: memref<1x128xf32, #tpu.memory_space<vmem>>, %arg6: memref<128x128xbf16, #tpu.memory_space<vmem>>, %arg7: memref<1x128xf32, #tpu.memory_space<vmem>>, %arg8: memref<128x128xbf16, #tpu.memory_space<vmem>>, %arg9: memref<1x128xf32, #tpu.memory_space<vmem>>, %arg10: memref<128x128xbf16, #tpu.memory_space<vmem>>, %arg11: memref<1x128xf32, #tpu.memory_space<vmem>>, %arg12: memref<128x128xbf16, #tpu.memory_space<vmem>>, %arg13: memref<1x128xf32, #tpu.memory_space<vmem>>, %arg14: memref<128x128xbf16, #tpu.memory_space<vmem>>, %arg15: memref<1x128xf32, #tpu.memory_space<vmem>>, %arg16: memref<128x256xbf16, #tpu.memory_space<vmem>>, %arg17: memref<1x256xf32, #tpu.memory_space<vmem>>, %arg18: memref<16x256xf32, #tpu.memory_space<vmem>>) attributes {dimension_semantics = [#tpu.dimension_semantics<parallel>], iteration_bounds = array<i64: 1>, scalar_prefetch = 0 : i64, scratch_operands = 0 : i64, tpu.core_type = #tpu.core_type<tc>, window_params = [{transform_indices = @transform_0, window_bounds = array<i64: 16, 256>}, {pipeline_mode = #tpu.pipeline_mode<synchronous>, transform_indices = @transform_1, window_bounds = array<i64: 256, 128>}, {pipeline_mode = #tpu.pipeline_mode<synchronous>, transform_indices = @transform_2, window_bounds = array<i64: 1, 128>}, {pipeline_mode = #tpu.pipeline_mode<synchronous>, transform_indices = @transform_3, window_bounds = array<i64: 128, 128>}, {pipeline_mode = #tpu.pipeline_mode<synchronous>, transform_indices = @transform_4, window_bounds = array<i64: 1, 128>}, {pipeline_mode = #tpu.pipeline_mode<synchronous>, transform_indices = @transform_5, window_bounds = array<i64: 128, 128>}, {pipeline_mode = #tpu.pipeline_mode<synchronous>, transform_indices = @transform_6, window_bounds = array<i64: 1, 128>}, {pipeline_mode = #tpu.pipeline_mode<synchronous>, transform_indices = @transform_7, window_bounds = array<i64: 128, 128>}, {pipeline_mode = #tpu.pipeline_mode<synchronous>, transform_indices = @transform_8, window_bounds = array<i64: 1, 128>}, {pipeline_mode = #tpu.pipeline_mode<synchronous>, transform_indices = @transform_9, window_bounds = array<i64: 128, 128>}, {pipeline_mode = #tpu.pipeline_mode<synchronous>, transform_indices = @transform_10, window_bounds = array<i64: 1, 128>}, {pipeline_mode = #tpu.pipeline_mode<synchronous>, transform_indices = @transform_11, window_bounds = array<i64: 128, 128>}, {pipeline_mode = #tpu.pipeline_mode<synchronous>, transform_indices = @transform_12, window_bounds = array<i64: 1, 128>}, {pipeline_mode = #tpu.pipeline_mode<synchronous>, transform_indices = @transform_13, window_bounds = array<i64: 128, 128>}, {pipeline_mode = #tpu.pipeline_mode<synchronous>, transform_indices = @transform_14, window_bounds = array<i64: 1, 128>}, {pipeline_mode = #tpu.pipeline_mode<synchronous>, transform_indices = @transform_15, window_bounds = array<i64: 128, 256>}, {pipeline_mode = #tpu.pipeline_mode<synchronous>, transform_indices = @transform_16, window_bounds = array<i64: 1, 256>}, {transform_indices = @transform_17, window_bounds = array<i64: 16, 256>}]} {
    %c0 = arith.constant 0 : index
    %c0_0 = arith.constant 0 : index
    %0 = vector.load %arg1[%c0, %c0_0] : memref<16x256xbf16, #tpu.memory_space<vmem>>, vector<16x256xbf16>
    %c0_1 = arith.constant 0 : index
    %c0_2 = arith.constant 0 : index
    %1 = vector.load %arg2[%c0_1, %c0_2] : memref<256x128xbf16, #tpu.memory_space<vmem>>, vector<256x128xbf16>
    %c0_3 = arith.constant 0 : index
    %c0_4 = arith.constant 0 : index
    %2 = vector.load %arg3[%c0_3, %c0_4] : memref<1x128xf32, #tpu.memory_space<vmem>>, vector<1x128xf32>
    %cst = arith.constant dense<0.000000e+00> : vector<16x128xf32>
    %3 = tpu.matmul %0, %1, %cst {dimension_numbers = #tpu.dot_dimension_numbers<[1], [0], [0], [1], [0, 0, 1, 1], [], []>} : vector<16x256xbf16>, vector<256x128xbf16>, vector<16x128xf32> -> vector<16x128xf32>
    %4 = vector.broadcast %2 : vector<1x128xf32> to vector<16x128xf32>
    %5 = arith.addf %3, %4 : vector<16x128xf32>
    %cst_5 = arith.constant 0.000000e+00 : f32
    %6 = vector.broadcast %cst_5 : f32 to vector<16x128xf32>
    %7 = arith.maximumf %5, %6 : vector<16x128xf32>
    %c0_6 = arith.constant 0 : index
    %c0_7 = arith.constant 0 : index
    %8 = vector.load %arg4[%c0_6, %c0_7] : memref<128x128xbf16, #tpu.memory_space<vmem>>, vector<128x128xbf16>
    %c0_8 = arith.constant 0 : index
    %c0_9 = arith.constant 0 : index
    %9 = vector.load %arg5[%c0_8, %c0_9] : memref<1x128xf32, #tpu.memory_space<vmem>>, vector<1x128xf32>
    %10 = arith.truncf %7 : vector<16x128xf32> to vector<16x128xbf16>
    %cst_10 = arith.constant dense<0.000000e+00> : vector<16x128xf32>
    %11 = tpu.matmul %10, %8, %cst_10 {dimension_numbers = #tpu.dot_dimension_numbers<[1], [0], [0], [1], [0, 0, 1, 1], [], []>} : vector<16x128xbf16>, vector<128x128xbf16>, vector<16x128xf32> -> vector<16x128xf32>
    %12 = vector.broadcast %9 : vector<1x128xf32> to vector<16x128xf32>
    %13 = arith.addf %11, %12 : vector<16x128xf32>
    %cst_11 = arith.constant 0.000000e+00 : f32
    %14 = vector.broadcast %cst_11 : f32 to vector<16x128xf32>
    %15 = arith.maximumf %13, %14 : vector<16x128xf32>
    %c0_12 = arith.constant 0 : index
    %c0_13 = arith.constant 0 : index
    %16 = vector.load %arg6[%c0_12, %c0_13] : memref<128x128xbf16, #tpu.memory_space<vmem>>, vector<128x128xbf16>
    %c0_14 = arith.constant 0 : index
    %c0_15 = arith.constant 0 : index
    %17 = vector.load %arg7[%c0_14, %c0_15] : memref<1x128xf32, #tpu.memory_space<vmem>>, vector<1x128xf32>
    %18 = arith.truncf %15 : vector<16x128xf32> to vector<16x128xbf16>
    %cst_16 = arith.constant dense<0.000000e+00> : vector<16x128xf32>
    %19 = tpu.matmul %18, %16, %cst_16 {dimension_numbers = #tpu.dot_dimension_numbers<[1], [0], [0], [1], [0, 0, 1, 1], [], []>} : vector<16x128xbf16>, vector<128x128xbf16>, vector<16x128xf32> -> vector<16x128xf32>
    %20 = vector.broadcast %17 : vector<1x128xf32> to vector<16x128xf32>
    %21 = arith.addf %19, %20 : vector<16x128xf32>
    %cst_17 = arith.constant 0.000000e+00 : f32
    %22 = vector.broadcast %cst_17 : f32 to vector<16x128xf32>
    %23 = arith.maximumf %21, %22 : vector<16x128xf32>
    %c0_18 = arith.constant 0 : index
    %c0_19 = arith.constant 0 : index
    %24 = vector.load %arg8[%c0_18, %c0_19] : memref<128x128xbf16, #tpu.memory_space<vmem>>, vector<128x128xbf16>
    %c0_20 = arith.constant 0 : index
    %c0_21 = arith.constant 0 : index
    %25 = vector.load %arg9[%c0_20, %c0_21] : memref<1x128xf32, #tpu.memory_space<vmem>>, vector<1x128xf32>
    %26 = arith.truncf %23 : vector<16x128xf32> to vector<16x128xbf16>
    %cst_22 = arith.constant dense<0.000000e+00> : vector<16x128xf32>
    %27 = tpu.matmul %26, %24, %cst_22 {dimension_numbers = #tpu.dot_dimension_numbers<[1], [0], [0], [1], [0, 0, 1, 1], [], []>} : vector<16x128xbf16>, vector<128x128xbf16>, vector<16x128xf32> -> vector<16x128xf32>
    %28 = vector.broadcast %25 : vector<1x128xf32> to vector<16x128xf32>
    %29 = arith.addf %27, %28 : vector<16x128xf32>
    %c0_23 = arith.constant 0 : index
    %c0_24 = arith.constant 0 : index
    %30 = vector.load %arg10[%c0_23, %c0_24] : memref<128x128xbf16, #tpu.memory_space<vmem>>, vector<128x128xbf16>
    %c0_25 = arith.constant 0 : index
    %c0_26 = arith.constant 0 : index
    %31 = vector.load %arg11[%c0_25, %c0_26] : memref<1x128xf32, #tpu.memory_space<vmem>>, vector<1x128xf32>
    %32 = arith.truncf %29 : vector<16x128xf32> to vector<16x128xbf16>
    %cst_27 = arith.constant dense<0.000000e+00> : vector<16x128xf32>
    %33 = tpu.matmul %32, %30, %cst_27 {dimension_numbers = #tpu.dot_dimension_numbers<[1], [0], [0], [1], [0, 0, 1, 1], [], []>} : vector<16x128xbf16>, vector<128x128xbf16>, vector<16x128xf32> -> vector<16x128xf32>
    %34 = vector.broadcast %31 : vector<1x128xf32> to vector<16x128xf32>
    %35 = arith.addf %33, %34 : vector<16x128xf32>
    %cst_28 = arith.constant 0.000000e+00 : f32
    %36 = vector.broadcast %cst_28 : f32 to vector<16x128xf32>
    %37 = arith.maximumf %35, %36 : vector<16x128xf32>
    %c0_29 = arith.constant 0 : index
    %c0_30 = arith.constant 0 : index
    %38 = vector.load %arg12[%c0_29, %c0_30] : memref<128x128xbf16, #tpu.memory_space<vmem>>, vector<128x128xbf16>
    %c0_31 = arith.constant 0 : index
    %c0_32 = arith.constant 0 : index
    %39 = vector.load %arg13[%c0_31, %c0_32] : memref<1x128xf32, #tpu.memory_space<vmem>>, vector<1x128xf32>
    %40 = arith.truncf %37 : vector<16x128xf32> to vector<16x128xbf16>
    %cst_33 = arith.constant dense<0.000000e+00> : vector<16x128xf32>
    %41 = tpu.matmul %40, %38, %cst_33 {dimension_numbers = #tpu.dot_dimension_numbers<[1], [0], [0], [1], [0, 0, 1, 1], [], []>} : vector<16x128xbf16>, vector<128x128xbf16>, vector<16x128xf32> -> vector<16x128xf32>
    %42 = vector.broadcast %39 : vector<1x128xf32> to vector<16x128xf32>
    %43 = arith.addf %41, %42 : vector<16x128xf32>
    %cst_34 = arith.constant 0.000000e+00 : f32
    %44 = vector.broadcast %cst_34 : f32 to vector<16x128xf32>
    %45 = arith.maximumf %43, %44 : vector<16x128xf32>
    %c0_35 = arith.constant 0 : index
    %c0_36 = arith.constant 0 : index
    %46 = vector.load %arg14[%c0_35, %c0_36] : memref<128x128xbf16, #tpu.memory_space<vmem>>, vector<128x128xbf16>
    %c0_37 = arith.constant 0 : index
    %c0_38 = arith.constant 0 : index
    %47 = vector.load %arg15[%c0_37, %c0_38] : memref<1x128xf32, #tpu.memory_space<vmem>>, vector<1x128xf32>
    %48 = arith.truncf %45 : vector<16x128xf32> to vector<16x128xbf16>
    %cst_39 = arith.constant dense<0.000000e+00> : vector<16x128xf32>
    %49 = tpu.matmul %48, %46, %cst_39 {dimension_numbers = #tpu.dot_dimension_numbers<[1], [0], [0], [1], [0, 0, 1, 1], [], []>} : vector<16x128xbf16>, vector<128x128xbf16>, vector<16x128xf32> -> vector<16x128xf32>
    %50 = vector.broadcast %47 : vector<1x128xf32> to vector<16x128xf32>
    %51 = arith.addf %49, %50 : vector<16x128xf32>
    %cst_40 = arith.constant 0.000000e+00 : f32
    %52 = vector.broadcast %cst_40 : f32 to vector<16x128xf32>
    %53 = arith.maximumf %51, %52 : vector<16x128xf32>
    %c0_41 = arith.constant 0 : index
    %c0_42 = arith.constant 0 : index
    %54 = vector.load %arg16[%c0_41, %c0_42] : memref<128x256xbf16, #tpu.memory_space<vmem>>, vector<128x256xbf16>
    %c0_43 = arith.constant 0 : index
    %c0_44 = arith.constant 0 : index
    %55 = vector.load %arg17[%c0_43, %c0_44] : memref<1x256xf32, #tpu.memory_space<vmem>>, vector<1x256xf32>
    %56 = arith.truncf %53 : vector<16x128xf32> to vector<16x128xbf16>
    %cst_45 = arith.constant dense<0.000000e+00> : vector<16x256xf32>
    %57 = tpu.matmul %56, %54, %cst_45 {dimension_numbers = #tpu.dot_dimension_numbers<[1], [0], [0], [1], [0, 0, 1, 1], [], []>} : vector<16x128xbf16>, vector<128x256xbf16>, vector<16x256xf32> -> vector<16x256xf32>
    %58 = vector.broadcast %55 : vector<1x256xf32> to vector<16x256xf32>
    %59 = arith.addf %57, %58 : vector<16x256xf32>
    %c0_46 = arith.constant 0 : index
    %c0_47 = arith.constant 0 : index
    %60 = vector.load %arg18[%c0_46, %c0_47] : memref<16x256xf32, #tpu.memory_space<vmem>>, vector<16x256xf32>
    tpu.vector_store %arg18[%c0_46, %c0_47], %59 {strides = array<i32>} : memref<16x256xf32, #tpu.memory_space<vmem>>, vector<16x256xf32>,
    return
  }
  func.func @transform_0(%arg0: i32) -> (i32, i32) {
    %c0_i32 = arith.constant 0 : i32
    %c0_i32_0 = arith.constant 0 : i32
    return %arg0, %c0_i32 : i32, i32
  }
  func.func @transform_1(%arg0: i32) -> (i32, i32) {
    %c0_i32 = arith.constant 0 : i32
    %c0_i32_0 = arith.constant 0 : i32
    %c0_i32_1 = arith.constant 0 : i32
    return %c0_i32, %c0_i32_0 : i32, i32
  }
  func.func @transform_2(%arg0: i32) -> (i32, i32) {
    %c0_i32 = arith.constant 0 : i32
    %c0_i32_0 = arith.constant 0 : i32
    %c0_i32_1 = arith.constant 0 : i32
    return %c0_i32, %c0_i32_0 : i32, i32
  }
  func.func @transform_3(%arg0: i32) -> (i32, i32) {
    %c0_i32 = arith.constant 0 : i32
    %c0_i32_0 = arith.constant 0 : i32
    %c0_i32_1 = arith.constant 0 : i32
    return %c0_i32, %c0_i32_0 : i32, i32
  }
  func.func @transform_4(%arg0: i32) -> (i32, i32) {
    %c0_i32 = arith.constant 0 : i32
    %c0_i32_0 = arith.constant 0 : i32
    %c0_i32_1 = arith.constant 0 : i32
    return %c0_i32, %c0_i32_0 : i32, i32
  }
  func.func @transform_5(%arg0: i32) -> (i32, i32) {
    %c0_i32 = arith.constant 0 : i32
    %c0_i32_0 = arith.constant 0 : i32
    %c0_i32_1 = arith.constant 0 : i32
    return %c0_i32, %c0_i32_0 : i32, i32
  }
  func.func @transform_6(%arg0: i32) -> (i32, i32) {
    %c0_i32 = arith.constant 0 : i32
    %c0_i32_0 = arith.constant 0 : i32
    %c0_i32_1 = arith.constant 0 : i32
    return %c0_i32, %c0_i32_0 : i32, i32
  }
  func.func @transform_7(%arg0: i32) -> (i32, i32) {
    %c0_i32 = arith.constant 0 : i32
    %c0_i32_0 = arith.constant 0 : i32
    %c0_i32_1 = arith.constant 0 : i32
    return %c0_i32, %c0_i32_0 : i32, i32
  }
  func.func @transform_8(%arg0: i32) -> (i32, i32) {
    %c0_i32 = arith.constant 0 : i32
    %c0_i32_0 = arith.constant 0 : i32
    %c0_i32_1 = arith.constant 0 : i32
    return %c0_i32, %c0_i32_0 : i32, i32
  }
  func.func @transform_9(%arg0: i32) -> (i32, i32) {
    %c0_i32 = arith.constant 0 : i32
    %c0_i32_0 = arith.constant 0 : i32
    %c0_i32_1 = arith.constant 0 : i32
    return %c0_i32, %c0_i32_0 : i32, i32
  }
  func.func @transform_10(%arg0: i32) -> (i32, i32) {
    %c0_i32 = arith.constant 0 : i32
    %c0_i32_0 = arith.constant 0 : i32
    %c0_i32_1 = arith.constant 0 : i32
    return %c0_i32, %c0_i32_0 : i32, i32
  }
  func.func @transform_11(%arg0: i32) -> (i32, i32) {
    %c0_i32 = arith.constant 0 : i32
    %c0_i32_0 = arith.constant 0 : i32
    %c0_i32_1 = arith.constant 0 : i32
    return %c0_i32, %c0_i32_0 : i32, i32
  }
  func.func @transform_12(%arg0: i32) -> (i32, i32) {
    %c0_i32 = arith.constant 0 : i32
    %c0_i32_0 = arith.constant 0 : i32
    %c0_i32_1 = arith.constant 0 : i32
    return %c0_i32, %c0_i32_0 : i32, i32
  }
  func.func @transform_13(%arg0: i32) -> (i32, i32) {
    %c0_i32 = arith.constant 0 : i32
    %c0_i32_0 = arith.constant 0 : i32
    %c0_i32_1 = arith.constant 0 : i32
    return %c0_i32, %c0_i32_0 : i32, i32
  }
  func.func @transform_14(%arg0: i32) -> (i32, i32) {
    %c0_i32 = arith.constant 0 : i32
    %c0_i32_0 = arith.constant 0 : i32
    %c0_i32_1 = arith.constant 0 : i32
    return %c0_i32, %c0_i32_0 : i32, i32
  }
  func.func @transform_15(%arg0: i32) -> (i32, i32) {
    %c0_i32 = arith.constant 0 : i32
    %c0_i32_0 = arith.constant 0 : i32
    %c0_i32_1 = arith.constant 0 : i32
    return %c0_i32, %c0_i32_0 : i32, i32
  }
  func.func @transform_16(%arg0: i32) -> (i32, i32) {
    %c0_i32 = arith.constant 0 : i32
    %c0_i32_0 = arith.constant 0 : i32
    %c0_i32_1 = arith.constant 0 : i32
    return %c0_i32, %c0_i32_0 : i32, i32
  }
  func.func @transform_17(%arg0: i32) -> (i32, i32) {
    %c0_i32 = arith.constant 0 : i32
    %c0_i32_0 = arith.constant 0 : i32
    return %arg0, %c0_i32 : i32, i32
  }
}

</mosaic_0001>

<llo_original>
// kernel: _autoencoder_padded.1
$region0: #{_autoencoder_padded.1}
  #allocation0 [shape = 'u32[]', space=smem, size = 0x4, offset = 0x4, fixed_abs, tag = 'smem constant byte address 0x4 - core index']
  #allocation1 [shape = 'u32[144,128]{1,0:T(1,128)}', space=vmem, size = 0x12000, scoped, tag = 'internal scratch']
  %s0 = inlined_call_operand.hbm [shape: bf16[16,256], index: 0, kind: input, shape index: {}]
  %s1 = inlined_call_operand.hbm [shape: bf16[256,128], index: 1, kind: input, shape index: {}]
  %s2 = inlined_call_operand.vmem [shape: f32[1,128], index: 2, kind: input, shape index: {}]
  %s3 = inlined_call_operand.hbm [shape: bf16[128,128], index: 3, kind: input, shape index: {}]
  %s4 = inlined_call_operand.vmem [shape: f32[1,128], index: 4, kind: input, shape index: {}]
  %s5 = inlined_call_operand.hbm [shape: bf16[128,128], index: 5, kind: input, shape index: {}]
  %s6 = inlined_call_operand.vmem [shape: f32[1,128], index: 6, kind: input, shape index: {}]
  %s7 = inlined_call_operand.hbm [shape: bf16[128,128], index: 7, kind: input, shape index: {}]
  %s8 = inlined_call_operand.vmem [shape: f32[1,128], index: 8, kind: input, shape index: {}]
  %s9 = inlined_call_operand.hbm [shape: bf16[128,128], index: 9, kind: input, shape index: {}]
  %s10 = inlined_call_operand.vmem [shape: f32[1,128], index: 10, kind: input, shape index: {}]
  %s11 = inlined_call_operand.hbm [shape: bf16[128,128], index: 11, kind: input, shape index: {}]
  %s12 = inlined_call_operand.vmem [shape: f32[1,128], index: 12, kind: input, shape index: {}]
  %s13 = inlined_call_operand.hbm [shape: bf16[128,128], index: 13, kind: input, shape index: {}]
  %s14 = inlined_call_operand.vmem [shape: f32[1,128], index: 14, kind: input, shape index: {}]
  %s15 = inlined_call_operand.hbm [shape: bf16[128,256], index: 15, kind: input, shape index: {}]
  %s16 = inlined_call_operand.vmem [shape: f32[1,256], index: 16, kind: input, shape index: {}]
  %s17 = inlined_call_operand.hbm [shape: f32[16,256], index: 17, kind: output, shape index: {}]
  %s18 = sld [smem:[#allocation0]]
  $region114: #{_autoencoder_padded.1} parent=0
    _
  %s20 = ssub.s32 1, %s18
  %s21 = scalar_select 0, %s20, %s18
  $region1: #{_autoencoder_padded.1} parent=0
    #allocation2 [shape = 'u8[8192]{0}', space=vmem, size = 0x2000, scoped, tag = 'input window, operand 0, single buffered']
    #allocation3 [shape = 's32[1]{0}', space=sflag, size = 0x4, scoped, tag = 'scoped memory for _autoencoder_padded.1']
    #allocation4 [shape = 's32[1]{0}', space=sflag, size = 0x4, scoped, tag = 'scoped memory for _autoencoder_padded.1']
    #allocation5 [shape = 'u8[65536]{0}', space=vmem, size = 0x10000, scoped, tag = 'input window, operand 1, single buffered']
    #allocation6 [shape = 's32[1]{0}', space=sflag, size = 0x4, scoped, tag = 'scoped memory for _autoencoder_padded.1']
    #allocation7 [shape = 'u8[32768]{0}', space=vmem, size = 0x8000, scoped, tag = 'input window, operand 3, single buffered']
    #allocation8 [shape = 'u8[32768]{0}', space=vmem, size = 0x8000, scoped, tag = 'input window, operand 5, single buffered']
    #allocation9 [shape = 's32[1]{0}', space=sflag, size = 0x4, scoped, tag = 'scoped memory for _autoencoder_padded.1']
    #allocation10 [shape = 'u8[32768]{0}', space=vmem, size = 0x8000, scoped, tag = 'input window, operand 7, single buffered']
    #allocation11 [shape = 'u8[32768]{0}', space=vmem, size = 0x8000, scoped, tag = 'input window, operand 9, single buffered']
    #allocation12 [shape = 's32[1]{0}', space=sflag, size = 0x4, scoped, tag = 'scoped memory for _autoencoder_padded.1']
    #allocation13 [shape = 'u8[32768]{0}', space=vmem, size = 0x8000, scoped, tag = 'input window, operand 11, single buffered']
    #allocation14 [shape = 'u8[32768]{0}', space=vmem, size = 0x8000, scoped, tag = 'input window, operand 13, single buffered']
    #allocation15 [shape = 's32[1]{0}', space=sflag, size = 0x4, scoped, tag = 'scoped memory for _autoencoder_padded.1']
    #allocation16 [shape = 'u8[65536]{0}', space=vmem, size = 0x10000, scoped, tag = 'input window, operand 15, single buffered']
    #allocation17 [shape = 'u8[16384]{0}', space=vmem, size = 0x4000, scoped, tag = 'output window, operand 0, single buffered']
    %22 = vsyncpa [#allocation3], 0
    %23 = vsyncpa [#allocation6], 0
    %24 = vsyncpa [#allocation9], 0
    %25 = vsyncpa [#allocation12], 0
    %26 = vsyncpa [#allocation15], 0
    %27 = vsyncpa [#allocation4], 0
    // Predicated region
    $region2: #{_autoencoder_padded.1} parent=1 // pred_check
      _
    $region3: #{_autoencoder_padded.1} parent=1 // pred_check_branch
      %29 = sbr.rel (0) target = $region5
    $region4: #{_autoencoder_padded.1} parent=1 // pred_region
      %s31 = ssub.s32 256, 256
      %32 = vsyncadd [#allocation3], %s31
      %s33 = sshll.u32 [#allocation2], 4
      %s34 = int_to_ptr.vmem [resolvable:$true] %s33
      %39 = dma.hbm_to_vmem [thread:$0]  %s0, 256, %s34, [#allocation3], 128, 128, 8
    $region5: #{_autoencoder_padded.1} parent=1 // pred_fallthru
      _
    // Predicated region
    $region6: #{_autoencoder_padded.1} parent=1 // pred_check
      _
    $region7: #{_autoencoder_padded.1} parent=1 // pred_check_branch
      %41 = sbr.rel (0) target = $region9
    $region8: #{_autoencoder_padded.1} parent=1 // pred_region
      %s43 = ssub.s32 2048, 2048
      %44 = vsyncadd [#allocation6], %s43
      %s45 = sshll.u32 [#allocation5], 4
      %s46 = int_to_ptr.vmem [resolvable:$true] %s45
      %51 = dma.hbm_to_vmem [thread:$0]  %s1, 2048, %s46, [#allocation6], 64, 64, 4
    $region9: #{_autoencoder_padded.1} parent=1 // pred_fallthru
      _
    // Predicated region
    $region10: #{_autoencoder_padded.1} parent=1 // pred_check
      _
    $region11: #{_autoencoder_padded.1} parent=1 // pred_check_branch
      %53 = sbr.rel (0) target = $region13
    $region12: #{_autoencoder_padded.1} parent=1 // pred_region
      _
    $region13: #{_autoencoder_padded.1} parent=1 // pred_fallthru
      _
    // Predicated region
    $region14: #{_autoencoder_padded.1} parent=1 // pred_check
      _
    $region15: #{_autoencoder_padded.1} parent=1 // pred_check_branch
      %55 = sbr.rel (0) target = $region17
    $region16: #{_autoencoder_padded.1} parent=1 // pred_region
      %s57 = ssub.s32 1024, 1024
      %58 = vsyncadd [#allocation6], %s57
      %s59 = sshll.u32 [#allocation7], 4
      %s60 = int_to_ptr.vmem [resolvable:$true] %s59
      %65 = dma.hbm_to_vmem [thread:$0]  %s3, 1024, %s60, [#allocation6], 64, 64, 4
    $region17: #{_autoencoder_padded.1} parent=1 // pred_fallthru
      _
    // Predicated region
    $region18: #{_autoencoder_padded.1} parent=1 // pred_check
      _
    $region19: #{_autoencoder_padded.1} parent=1 // pred_check_branch
      %67 = sbr.rel (0) target = $region21
    $region20: #{_autoencoder_padded.1} parent=1 // pred_region
      _
    $region21: #{_autoencoder_padded.1} parent=1 // pred_fallthru
      _
    // Predicated region
    $region22: #{_autoencoder_padded.1} parent=1 // pred_check
      _
    $region23: #{_autoencoder_padded.1} parent=1 // pred_check_branch
      %69 = sbr.rel (0) target = $region25
    $region24: #{_autoencoder_padded.1} parent=1 // pred_region
      %s71 = ssub.s32 1024, 1024
      %72 = vsyncadd [#allocation9], %s71
      %s73 = sshll.u32 [#allocation8], 4
      %s74 = int_to_ptr.vmem [resolvable:$true] %s73
      %79 = dma.hbm_to_vmem [thread:$0]  %s5, 1024, %s74, [#allocation9], 64, 64, 4
    $region25: #{_autoencoder_padded.1} parent=1 // pred_fallthru
      _
    // Predicated region
    $region26: #{_autoencoder_padded.1} parent=1 // pred_check
      _
    $region27: #{_autoencoder_padded.1} parent=1 // pred_check_branch
      %81 = sbr.rel (0) target = $region29
    $region28: #{_autoencoder_padded.1} parent=1 // pred_region
      _
    $region29: #{_autoencoder_padded.1} parent=1 // pred_fallthru
      _
    // Predicated region
    $region30: #{_autoencoder_padded.1} parent=1 // pred_check
      _
    $region31: #{_autoencoder_padded.1} parent=1 // pred_check_branch
      %83 = sbr.rel (0) target = $region33
    $region32: #{_autoencoder_padded.1} parent=1 // pred_region
      %s85 = ssub.s32 1024, 1024
      %86 = vsyncadd [#allocation9], %s85
      %s87 = sshll.u32 [#allocation10], 4
      %s88 = int_to_ptr.vmem [resolvable:$true] %s87
      %93 = dma.hbm_to_vmem [thread:$0]  %s7, 1024, %s88, [#allocation9], 64, 64, 4
    $region33: #{_autoencoder_padded.1} parent=1 // pred_fallthru
      _
    // Predicated region
    $region34: #{_autoencoder_padded.1} parent=1 // pred_check
      _
    $region35: #{_autoencoder_padded.1} parent=1 // pred_check_branch
      %95 = sbr.rel (0) target = $region37
    $region36: #{_autoencoder_padded.1} parent=1 // pred_region
      _
    $region37: #{_autoencoder_padded.1} parent=1 // pred_fallthru
      _
    // Predicated region
    $region38: #{_autoencoder_padded.1} parent=1 // pred_check
      _
    $region39: #{_autoencoder_padded.1} parent=1 // pred_check_branch
      %97 = sbr.rel (0) target = $region41
    $region40: #{_autoencoder_padded.1} parent=1 // pred_region
      %s99 = ssub.s32 1024, 1024
      %100 = vsyncadd [#allocation12], %s99
      %s101 = sshll.u32 [#allocation11], 4
      %s102 = int_to_ptr.vmem [resolvable:$true] %s101
      %107 = dma.hbm_to_vmem [thread:$0]  %s9, 1024, %s102, [#allocation12], 64, 64, 4
    $region41: #{_autoencoder_padded.1} parent=1 // pred_fallthru
      _
    // Predicated region
    $region42: #{_autoencoder_padded.1} parent=1 // pred_check
      _
    $region43: #{_autoencoder_padded.1} parent=1 // pred_check_branch
      %109 = sbr.rel (0) target = $region45
    $region44: #{_autoencoder_padded.1} parent=1 // pred_region
      _
    $region45: #{_autoencoder_padded.1} parent=1 // pred_fallthru
      _
    // Predicated region
    $region46: #{_autoencoder_padded.1} parent=1 // pred_check
      _
    $region47: #{_autoencoder_padded.1} parent=1 // pred_check_branch
      %111 = sbr.rel (0) target = $region49
    $region48: #{_autoencoder_padded.1} parent=1 // pred_region
      %s113 = ssub.s32 1024, 1024
      %114 = vsyncadd [#allocation12], %s113
      %s115 = sshll.u32 [#allocation13], 4
      %s116 = int_to_ptr.vmem [resolvable:$true] %s115
      %121 = dma.hbm_to_vmem [thread:$0]  %s11, 1024, %s116, [#allocation12], 64, 64, 4
    $region49: #{_autoencoder_padded.1} parent=1 // pred_fallthru
      _
    // Predicated region
    $region50: #{_autoencoder_padded.1} parent=1 // pred_check
      _
    $region51: #{_autoencoder_padded.1} parent=1 // pred_check_branch
      %123 = sbr.rel (0) target = $region53
    $region52: #{_autoencoder_padded.1} parent=1 // pred_region
      _
    $region53: #{_autoencoder_padded.1} parent=1 // pred_fallthru
      _
    // Predicated region
    $region54: #{_autoencoder_padded.1} parent=1 // pred_check
      _
    $region55: #{_autoencoder_padded.1} parent=1 // pred_check_branch
      %125 = sbr.rel (0) target = $region57
    $region56: #{_autoencoder_padded.1} parent=1 // pred_region
      %s127 = ssub.s32 1024, 1024
      %128 = vsyncadd [#allocation15], %s127
      %s129 = sshll.u32 [#allocation14], 4
      %s130 = int_to_ptr.vmem [resolvable:$true] %s129
      %135 = dma.hbm_to_vmem [thread:$0]  %s13, 1024, %s130, [#allocation15], 64, 64, 4
    $region57: #{_autoencoder_padded.1} parent=1 // pred_fallthru
      _
    // Predicated region
    $region58: #{_autoencoder_padded.1} parent=1 // pred_check
      _
    $region59: #{_autoencoder_padded.1} parent=1 // pred_check_branch
      %137 = sbr.rel (0) target = $region61
    $region60: #{_autoencoder_padded.1} parent=1 // pred_region
      _
    $region61: #{_autoencoder_padded.1} parent=1 // pred_fallthru
      _
    // Predicated region
    $region62: #{_autoencoder_padded.1} parent=1 // pred_check
      _
    $region63: #{_autoencoder_padded.1} parent=1 // pred_check_branch
      %139 = sbr.rel (0) target = $region65
    $region64: #{_autoencoder_padded.1} parent=1 // pred_region
      %s141 = ssub.s32 2048, 2048
      %142 = vsyncadd [#allocation15], %s141
      %s143 = sshll.u32 [#allocation16], 4
      %s144 = int_to_ptr.vmem [resolvable:$true] %s143
      %149 = dma.hbm_to_vmem [thread:$0]  %s15, 2048, %s144, [#allocation15], 128, 128, 8
    $region65: #{_autoencoder_padded.1} parent=1 // pred_fallthru
      _
    // Predicated region
    $region66: #{_autoencoder_padded.1} parent=1 // pred_check
      _
    $region67: #{_autoencoder_padded.1} parent=1 // pred_check_branch
      %151 = sbr.rel (0) target = $region69
    $region68: #{_autoencoder_padded.1} parent=1 // pred_region
      _
    $region69: #{_autoencoder_padded.1} parent=1 // pred_fallthru
      _
    // Predicated region
    $region70: #{_autoencoder_padded.1} parent=1 // pred_check
      _
    $region71: #{_autoencoder_padded.1} parent=1 // pred_check_branch
      %153 = sbr.rel (0) target = $region73
    $region72: #{_autoencoder_padded.1} parent=1 // pred_region
      %154 = dma.done [#allocation3], 256
    $region73: #{_autoencoder_padded.1} parent=1 // pred_fallthru
      _
    // Predicated region
    $region74: #{_autoencoder_padded.1} parent=1 // pred_check
      _
    $region75: #{_autoencoder_padded.1} parent=1 // pred_check_branch
      %156 = sbr.rel (0) target = $region77
    $region76: #{_autoencoder_padded.1} parent=1 // pred_region
      %157 = dma.done [#allocation6], 2048
    $region77: #{_autoencoder_padded.1} parent=1 // pred_fallthru
      _
    // Predicated region
    $region78: #{_autoencoder_padded.1} parent=1 // pred_check
      _
    $region79: #{_autoencoder_padded.1} parent=1 // pred_check_branch
      %159 = sbr.rel (0) target = $region81
    $region80: #{_autoencoder_padded.1} parent=1 // pred_region
      %160 = dma.done [#allocation6], 1024
    $region81: #{_autoencoder_padded.1} parent=1 // pred_fallthru
      _
    // Predicated region
    $region82: #{_autoencoder_padded.1} parent=1 // pred_check
      _
    $region83: #{_autoencoder_padded.1} parent=1 // pred_check_branch
      %162 = sbr.rel (0) target = $region85
    $region84: #{_autoencoder_padded.1} parent=1 // pred_region
      %163 = dma.done [#allocation9], 1024
    $region85: #{_autoencoder_padded.1} parent=1 // pred_fallthru
      _
    // Predicated region
    $region86: #{_autoencoder_padded.1} parent=1 // pred_check
      _
    $region87: #{_autoencoder_padded.1} parent=1 // pred_check_branch
      %165 = sbr.rel (0) target = $region89
    $region88: #{_autoencoder_padded.1} parent=1 // pred_region
      %166 = dma.done [#allocation9], 1024
    $region89: #{_autoencoder_padded.1} parent=1 // pred_fallthru
      _
    // Predicated region
    $region90: #{_autoencoder_padded.1} parent=1 // pred_check
      _
    $region91: #{_autoencoder_padded.1} parent=1 // pred_check_branch
      %168 = sbr.rel (0) target = $region93
    $region92: #{_autoencoder_padded.1} parent=1 // pred_region
      %169 = dma.done [#allocation12], 1024
    $region93: #{_autoencoder_padded.1} parent=1 // pred_fallthru
      _
    // Predicated region
    $region94: #{_autoencoder_padded.1} parent=1 // pred_check
      _
    $region95: #{_autoencoder_padded.1} parent=1 // pred_check_branch
      %171 = sbr.rel (0) target = $region97
    $region96: #{_autoencoder_padded.1} parent=1 // pred_region
      %172 = dma.done [#allocation12], 1024
    $region97: #{_autoencoder_padded.1} parent=1 // pred_fallthru
      _
    // Predicated region
    $region98: #{_autoencoder_padded.1} parent=1 // pred_check
      _
    $region99: #{_autoencoder_padded.1} parent=1 // pred_check_branch
      %174 = sbr.rel (0) target = $region101
    $region100: #{_autoencoder_padded.1} parent=1 // pred_region
      %175 = dma.done [#allocation15], 1024
    $region101: #{_autoencoder_padded.1} parent=1 // pred_fallthru
      _
    // Predicated region
    $region102: #{_autoencoder_padded.1} parent=1 // pred_check
      _
    $region103: #{_autoencoder_padded.1} parent=1 // pred_check_branch
      %177 = sbr.rel (0) target = $region105
    $region104: #{_autoencoder_padded.1} parent=1 // pred_region
      %178 = dma.done [#allocation15], 2048
    $region105: #{_autoencoder_padded.1} parent=1 // pred_fallthru
      _
    %v180 = vld [vmem:[#allocation2] sm:$0xff]
    %v181 = vld [vmem:[#allocation2 + $0x8] sm:$0xff]
    %v182 = vld [vmem:[#allocation5] sm:$0xf]
    %v183 = vld [vmem:[#allocation5 + $0x4] sm:$0xf]
    %v184 = vld [vmem:[#allocation5 + $0x8] sm:$0xf]
    %v185 = vld [vmem:[#allocation5 + $0xc] sm:$0xf]
    %v186 = vld [vmem:[#allocation5 + $0x10] sm:$0xf]
    %v187 = vld [vmem:[#allocation5 + $0x14] sm:$0xf]
    %v188 = vld [vmem:[#allocation5 + $0x18] sm:$0xf]
    %v189 = vld [vmem:[#allocation5 + $0x1c] sm:$0xf]
    %v190 = vld [vmem:[#allocation5 + $0x20] sm:$0xf]
    %v191 = vld [vmem:[#allocation5 + $0x24] sm:$0xf]
    %v192 = vld [vmem:[#allocation5 + $0x28] sm:$0xf]
    %v193 = vld [vmem:[#allocation5 + $0x2c] sm:$0xf]
    %v194 = vld [vmem:[#allocation5 + $0x30] sm:$0xf]
    %v195 = vld [vmem:[#allocation5 + $0x34] sm:$0xf]
    %v196 = vld [vmem:[#allocation5 + $0x38] sm:$0xf]
    %v197 = vld [vmem:[#allocation5 + $0x3c] sm:$0xf]
    %v198 = vld [vmem:[#allocation5 + $0x40] sm:$0xf]
    %v199 = vld [vmem:[#allocation5 + $0x44] sm:$0xf]
    %v200 = vld [vmem:[#allocation5 + $0x48] sm:$0xf]
    %v201 = vld [vmem:[#allocation5 + $0x4c] sm:$0xf]
    %v202 = vld [vmem:[#allocation5 + $0x50] sm:$0xf]
    %v203 = vld [vmem:[#allocation5 + $0x54] sm:$0xf]
    %v204 = vld [vmem:[#allocation5 + $0x58] sm:$0xf]
    %v205 = vld [vmem:[#allocation5 + $0x5c] sm:$0xf]
    %v206 = vld [vmem:[#allocation5 + $0x60] sm:$0xf]
    %v207 = vld [vmem:[#allocation5 + $0x64] sm:$0xf]
    %v208 = vld [vmem:[#allocation5 + $0x68] sm:$0xf]
    %v209 = vld [vmem:[#allocation5 + $0x6c] sm:$0xf]
    %v210 = vld [vmem:[#allocation5 + $0x70] sm:$0xf]
    %v211 = vld [vmem:[#allocation5 + $0x74] sm:$0xf]
    %v212 = vld [vmem:[#allocation5 + $0x78] sm:$0xf]
    %v213 = vld [vmem:[#allocation5 + $0x7c] sm:$0xf]
    %v214 = vld [vmem:[%s2] sm:$0x1]
    %v216 = vlaneseq
    %v217 = vshrl.u32 %v216, 7
    %v218 = vsub.s32 0, %v217
    %v219 = vrot.slane %v214, %v218
    %v223 = vunpack.c.l.b16 %v180
    %v224 = vunpack.c.h.b16 %v180
    %v225 = vunpack.c.l.b16 %v181
    %v226 = vunpack.c.h.b16 %v181
    %v227 = vpack.c.b16 %v225, %v223
    %v228 = vpack.c.b16 %v226, %v224
    %v263 = vunpack.c.l.b16 %v182
    %v264 = vunpack.c.l.b16 %v183
    %v265 = vunpack.c.l.b16 %v184
    %v266 = vunpack.c.l.b16 %v185
    %v267 = vunpack.c.l.b16 %v186
    %v268 = vunpack.c.l.b16 %v187
    %v269 = vunpack.c.l.b16 %v188
    %v270 = vunpack.c.l.b16 %v189
    %v271 = vunpack.c.l.b16 %v190
    %v272 = vunpack.c.l.b16 %v191
    %v273 = vunpack.c.l.b16 %v192
    %v274 = vunpack.c.l.b16 %v193
    %v275 = vunpack.c.l.b16 %v194
    %v276 = vunpack.c.l.b16 %v195
    %v277 = vunpack.c.l.b16 %v196
    %v278 = vunpack.c.l.b16 %v197
    %v279 = vunpack.c.l.b16 %v198
    %v280 = vunpack.c.l.b16 %v199
    %v281 = vunpack.c.l.b16 %v200
    %v282 = vunpack.c.l.b16 %v201
    %v283 = vunpack.c.l.b16 %v202
    %v284 = vunpack.c.l.b16 %v203
    %v285 = vunpack.c.l.b16 %v204
    %v286 = vunpack.c.l.b16 %v205
    %v287 = vunpack.c.l.b16 %v206
    %v288 = vunpack.c.l.b16 %v207
    %v289 = vunpack.c.l.b16 %v208
    %v290 = vunpack.c.l.b16 %v209
    %v291 = vunpack.c.l.b16 %v210
    %v292 = vunpack.c.l.b16 %v211
    %v293 = vunpack.c.l.b16 %v212
    %v294 = vunpack.c.l.b16 %v213
    %v295 = vpack.c.b16 %v264, %v263
    %v296 = vpack.c.b16 %v266, %v265
    %v297 = vpack.c.b16 %v268, %v267
    %v298 = vpack.c.b16 %v270, %v269
    %v299 = vpack.c.b16 %v272, %v271
    %v300 = vpack.c.b16 %v274, %v273
    %v301 = vpack.c.b16 %v276, %v275
    %v302 = vpack.c.b16 %v278, %v277
    %v303 = vpack.c.b16 %v280, %v279
    %v304 = vpack.c.b16 %v282, %v281
    %v305 = vpack.c.b16 %v284, %v283
    %v306 = vpack.c.b16 %v286, %v285
    %v307 = vpack.c.b16 %v288, %v287
    %v308 = vpack.c.b16 %v290, %v289
    %v309 = vpack.c.b16 %v292, %v291
    %v310 = vpack.c.b16 %v294, %v293
    %327 = vmatprep.subr.bf16.mxu0 0
    %328 = vmatpush1.bf16.msra.mxu0 %v295
    %329 = vmatprep.subr.bf16.mxu0 0
    %330 = vmatpush1.bf16.msra.mxu0 %v296
    %331 = vmatprep.subr.bf16.mxu0 0
    %332 = vmatpush1.bf16.msra.mxu0 %v297
    %333 = vmatprep.subr.bf16.mxu0 0
    %334 = vmatpush1.bf16.msra.mxu0 %v298
    %335 = vmatprep.subr.bf16.mxu0 0
    %336 = vmatpush1.bf16.msra.mxu0 %v299
    %337 = vmatprep.subr.bf16.mxu0 0
    %338 = vmatpush1.bf16.msra.mxu0 %v300
    %339 = vmatprep.subr.bf16.mxu0 0
    %340 = vmatpush1.bf16.msra.mxu0 %v301
    %341 = vmatprep.subr.bf16.mxu0 0
    %342 = vmatpush1.bf16.msra.mxu0 %v302
    %343 = vmatprep.subr.bf16.mxu0 0
    %344 = vmatpush1.bf16.msra.mxu0 %v303
    %345 = vmatprep.subr.bf16.mxu0 0
    %346 = vmatpush1.bf16.msra.mxu0 %v304
    %347 = vmatprep.subr.bf16.mxu0 0
    %348 = vmatpush1.bf16.msra.mxu0 %v305
    %349 = vmatprep.subr.bf16.mxu0 0
    %350 = vmatpush1.bf16.msra.mxu0 %v306
    %351 = vmatprep.subr.bf16.mxu0 0
    %352 = vmatpush1.bf16.msra.mxu0 %v307
    %353 = vmatprep.subr.bf16.mxu0 0
    %354 = vmatpush1.bf16.msra.mxu0 %v308
    %355 = vmatprep.subr.bf16.mxu0 0
    %356 = vmatpush1.bf16.msra.mxu0 %v309
    %357 = vmatprep.subr.bf16.mxu0 0
    %358 = vmatpush1.bf16.msra.mxu0 %v310
    %359 = vmatprep.mubr.bf16.mxu0 %v228
    %360 = vmatmul.mubr.bf16.gmra.mrb[0].mxu0 %v227
    %v361 = vpop.f32.mrb[0].mxu0
    %v362 = vadd.f32 %v219, %v361
    %v363 = vpop.f32.mrb[0].mxu0
    %v364 = vpop.f32.mrb[0].mxu0
    %v365 = vadd.f32 %v219, %v364
    %v366 = vpop.f32.mrb[0].mxu0
    %367 = vdwg.mxu0
    %v368 = vmax.f32 %v362, 0.0
    %v369 = vmax.f32 %v365, 0.0
    %v370 = vld [vmem:[#allocation7] sm:$0xf]
    %v371 = vld [vmem:[#allocation7 + $0x4] sm:$0xf]
    %v372 = vld [vmem:[#allocation7 + $0x8] sm:$0xf]
    %v373 = vld [vmem:[#allocation7 + $0xc] sm:$0xf]
    %v374 = vld [vmem:[#allocation7 + $0x10] sm:$0xf]
    %v375 = vld [vmem:[#allocation7 + $0x14] sm:$0xf]
    %v376 = vld [vmem:[#allocation7 + $0x18] sm:$0xf]
    %v377 = vld [vmem:[#allocation7 + $0x1c] sm:$0xf]
    %v378 = vld [vmem:[#allocation7 + $0x20] sm:$0xf]
    %v379 = vld [vmem:[#allocation7 + $0x24] sm:$0xf]
    %v380 = vld [vmem:[#allocation7 + $0x28] sm:$0xf]
    %v381 = vld [vmem:[#allocation7 + $0x2c] sm:$0xf]
    %v382 = vld [vmem:[#allocation7 + $0x30] sm:$0xf]
    %v383 = vld [vmem:[#allocation7 + $0x34] sm:$0xf]
    %v384 = vld [vmem:[#allocation7 + $0x38] sm:$0xf]
    %v385 = vld [vmem:[#allocation7 + $0x3c] sm:$0xf]
    %v386 = vld [vmem:[%s4] sm:$0x1]
    %v387 = vpack.c.bf16 %v369, %v368
    %v389 = vlaneseq
    %v390 = vshrl.u32 %v389, 7
    %v391 = vsub.s32 0, %v390
    %v392 = vrot.slane %v386, %v391
    %v410 = vunpack.c.l.b16 %v370
    %v411 = vunpack.c.l.b16 %v371
    %v412 = vunpack.c.l.b16 %v372
    %v413 = vunpack.c.l.b16 %v373
    %v414 = vunpack.c.l.b16 %v374
    %v415 = vunpack.c.l.b16 %v375
    %v416 = vunpack.c.l.b16 %v376
    %v417 = vunpack.c.l.b16 %v377
    %v418 = vunpack.c.l.b16 %v378
    %v419 = vunpack.c.l.b16 %v379
    %v420 = vunpack.c.l.b16 %v380
    %v421 = vunpack.c.l.b16 %v381
    %v422 = vunpack.c.l.b16 %v382
    %v423 = vunpack.c.l.b16 %v383
    %v424 = vunpack.c.l.b16 %v384
    %v425 = vunpack.c.l.b16 %v385
    %v426 = vpack.c.b16 %v411, %v410
    %v427 = vpack.c.b16 %v413, %v412
    %v428 = vpack.c.b16 %v415, %v414
    %v429 = vpack.c.b16 %v417, %v416
    %v430 = vpack.c.b16 %v419, %v418
    %v431 = vpack.c.b16 %v421, %v420
    %v432 = vpack.c.b16 %v423, %v422
    %v433 = vpack.c.b16 %v425, %v424
    %442 = vmatprep.subr.bf16.mxu0 0
    %443 = vmatpush1.bf16.msra.mxu0 %v426
    %444 = vmatprep.subr.bf16.mxu0 0
    %445 = vmatpush1.bf16.msra.mxu0 %v427
    %446 = vmatprep.subr.bf16.mxu0 0
    %447 = vmatpush1.bf16.msra.mxu0 %v428
    %448 = vmatprep.subr.bf16.mxu0 0
    %449 = vmatpush1.bf16.msra.mxu0 %v429
    %450 = vmatprep.subr.bf16.mxu0 0
    %451 = vmatpush1.bf16.msra.mxu0 %v430
    %452 = vmatprep.subr.bf16.mxu0 0
    %453 = vmatpush1.bf16.msra.mxu0 %v431
    %454 = vmatprep.subr.bf16.mxu0 0
    %455 = vmatpush1.bf16.msra.mxu0 %v432
    %456 = vmatprep.subr.bf16.mxu0 0
    %457 = vmatpush1.bf16.msra.mxu0 %v433
    %458 = vmatprep.subr.bf16.mxu0 0
    %459 = vmatpush1.bf16.msra.mxu0 0
    %460 = vmatprep.subr.bf16.mxu0 0
    %461 = vmatpush1.bf16.msra.mxu0 0
    %462 = vmatprep.subr.bf16.mxu0 0
    %463 = vmatpush1.bf16.msra.mxu0 0
    %464 = vmatprep.subr.bf16.mxu0 0
    %465 = vmatpush1.bf16.msra.mxu0 0
    %466 = vmatprep.subr.bf16.mxu0 0
    %467 = vmatpush1.bf16.msra.mxu0 0
    %468 = vmatprep.subr.bf16.mxu0 0
    %469 = vmatpush1.bf16.msra.mxu0 0
    %470 = vmatprep.subr.bf16.mxu0 0
    %471 = vmatpush1.bf16.msra.mxu0 0
    %472 = vmatprep.subr.bf16.mxu0 0
    %473 = vmatpush1.bf16.msra.mxu0 0
    %474 = vmatprep.mubr.bf16.mxu0 0
    %475 = vmatmul.mubr.bf16.gmra.mrb[0].mxu0 %v387
    %v476 = vpop.f32.mrb[0].mxu0
    %v477 = vadd.f32 %v392, %v476
    %v478 = vpop.f32.mrb[0].mxu0
    %v479 = vpop.f32.mrb[0].mxu0
    %v480 = vadd.f32 %v392, %v479
    %v481 = vpop.f32.mrb[0].mxu0
    %482 = vdwg.mxu0
    %v483 = vmax.f32 %v477, 0.0
    %v484 = vmax.f32 %v480, 0.0
    %v485 = vld [vmem:[#allocation8] sm:$0xf]
    %v486 = vld [vmem:[#allocation8 + $0x4] sm:$0xf]
    %v487 = vld [vmem:[#allocation8 + $0x8] sm:$0xf]
    %v488 = vld [vmem:[#allocation8 + $0xc] sm:$0xf]
    %v489 = vld [vmem:[#allocation8 + $0x10] sm:$0xf]
    %v490 = vld [vmem:[#allocation8 + $0x14] sm:$0xf]
    %v491 = vld [vmem:[#allocation8 + $0x18] sm:$0xf]
    %v492 = vld [vmem:[#allocation8 + $0x1c] sm:$0xf]
    %v493 = vld [vmem:[#allocation8 + $0x20] sm:$0xf]
    %v494 = vld [vmem:[#allocation8 + $0x24] sm:$0xf]
    %v495 = vld [vmem:[#allocation8 + $0x28] sm:$0xf]
    %v496 = vld [vmem:[#allocation8 + $0x2c] sm:$0xf]
    %v497 = vld [vmem:[#allocation8 + $0x30] sm:$0xf]
    %v498 = vld [vmem:[#allocation8 + $0x34] sm:$0xf]
    %v499 = vld [vmem:[#allocation8 + $0x38] sm:$0xf]
    %v500 = vld [vmem:[#allocation8 + $0x3c] sm:$0xf]
    %v501 = vld [vmem:[%s6] sm:$0x1]
    %v502 = vpack.c.bf16 %v484, %v483
    %v504 = vlaneseq
    %v505 = vshrl.u32 %v504, 7
    %v506 = vsub.s32 0, %v505
    %v507 = vrot.slane %v501, %v506
    %v525 = vunpack.c.l.b16 %v485
    %v526 = vunpack.c.l.b16 %v486
    %v527 = vunpack.c.l.b16 %v487
    %v528 = vunpack.c.l.b16 %v488
    %v529 = vunpack.c.l.b16 %v489
    %v530 = vunpack.c.l.b16 %v490
    %v531 = vunpack.c.l.b16 %v491
    %v532 = vunpack.c.l.b16 %v492
    %v533 = vunpack.c.l.b16 %v493
    %v534 = vunpack.c.l.b16 %v494
    %v535 = vunpack.c.l.b16 %v495
    %v536 = vunpack.c.l.b16 %v496
    %v537 = vunpack.c.l.b16 %v497
    %v538 = vunpack.c.l.b16 %v498
    %v539 = vunpack.c.l.b16 %v499
    %v540 = vunpack.c.l.b16 %v500
    %v541 = vpack.c.b16 %v526, %v525
    %v542 = vpack.c.b16 %v528, %v527
    %v543 = vpack.c.b16 %v530, %v529
    %v544 = vpack.c.b16 %v532, %v531
    %v545 = vpack.c.b16 %v534, %v533
    %v546 = vpack.c.b16 %v536, %v535
    %v547 = vpack.c.b16 %v538, %v537
    %v548 = vpack.c.b16 %v540, %v539
    %557 = vmatprep.subr.bf16.mxu0 0
    %558 = vmatpush1.bf16.msra.mxu0 %v541
    %559 = vmatprep.subr.bf16.mxu0 0
    %560 = vmatpush1.bf16.msra.mxu0 %v542
    %561 = vmatprep.subr.bf16.mxu0 0
    %562 = vmatpush1.bf16.msra.mxu0 %v543
    %563 = vmatprep.subr.bf16.mxu0 0
    %564 = vmatpush1.bf16.msra.mxu0 %v544
    %565 = vmatprep.subr.bf16.mxu0 0
    %566 = vmatpush1.bf16.msra.mxu0 %v545
    %567 = vmatprep.subr.bf16.mxu0 0
    %568 = vmatpush1.bf16.msra.mxu0 %v546
    %569 = vmatprep.subr.bf16.mxu0 0
    %570 = vmatpush1.bf16.msra.mxu0 %v547
    %571 = vmatprep.subr.bf16.mxu0 0
    %572 = vmatpush1.bf16.msra.mxu0 %v548
    %573 = vmatprep.subr.bf16.mxu0 0
    %574 = vmatpush1.bf16.msra.mxu0 0
    %575 = vmatprep.subr.bf16.mxu0 0
    %576 = vmatpush1.bf16.msra.mxu0 0
    %577 = vmatprep.subr.bf16.mxu0 0
    %578 = vmatpush1.bf16.msra.mxu0 0
    %579 = vmatprep.subr.bf16.mxu0 0
    %580 = vmatpush1.bf16.msra.mxu0 0
    %581 = vmatprep.subr.bf16.mxu0 0
    %582 = vmatpush1.bf16.msra.mxu0 0
    %583 = vmatprep.subr.bf16.mxu0 0
    %584 = vmatpush1.bf16.msra.mxu0 0
    %585 = vmatprep.subr.bf16.mxu0 0
    %586 = vmatpush1.bf16.msra.mxu0 0
    %587 = vmatprep.subr.bf16.mxu0 0
    %588 = vmatpush1.bf16.msra.mxu0 0
    %589 = vmatprep.mubr.bf16.mxu0 0
    %590 = vmatmul.mubr.bf16.gmra.mrb[0].mxu0 %v502
    %v591 = vpop.f32.mrb[0].mxu0
    %v592 = vadd.f32 %v507, %v591
    %v593 = vpop.f32.mrb[0].mxu0
    %v594 = vpop.f32.mrb[0].mxu0
    %v595 = vadd.f32 %v507, %v594
    %v596 = vpop.f32.mrb[0].mxu0
    %597 = vdwg.mxu0
    %v598 = vmax.f32 %v592, 0.0
    %v599 = vmax.f32 %v595, 0.0
    %v600 = vld [vmem:[#allocation10] sm:$0xf]
    %v601 = vld [vmem:[#allocation10 + $0x4] sm:$0xf]
    %v602 = vld [vmem:[#allocation10 + $0x8] sm:$0xf]
    %v603 = vld [vmem:[#allocation10 + $0xc] sm:$0xf]
    %v604 = vld [vmem:[#allocation10 + $0x10] sm:$0xf]
    %v605 = vld [vmem:[#allocation10 + $0x14] sm:$0xf]
    %v606 = vld [vmem:[#allocation10 + $0x18] sm:$0xf]
    %v607 = vld [vmem:[#allocation10 + $0x1c] sm:$0xf]
    %v608 = vld [vmem:[#allocation10 + $0x20] sm:$0xf]
    %v609 = vld [vmem:[#allocation10 + $0x24] sm:$0xf]
    %v610 = vld [vmem:[#allocation10 + $0x28] sm:$0xf]
    %v611 = vld [vmem:[#allocation10 + $0x2c] sm:$0xf]
    %v612 = vld [vmem:[#allocation10 + $0x30] sm:$0xf]
    %v613 = vld [vmem:[#allocation10 + $0x34] sm:$0xf]
    %v614 = vld [vmem:[#allocation10 + $0x38] sm:$0xf]
    %v615 = vld [vmem:[#allocation10 + $0x3c] sm:$0xf]
    %v616 = vld [vmem:[%s8] sm:$0x1]
    %v617 = vpack.c.bf16 %v599, %v598
    %v619 = vlaneseq
    %v620 = vshrl.u32 %v619, 7
    %v621 = vsub.s32 0, %v620
    %v622 = vrot.slane %v616, %v621
    %v640 = vunpack.c.l.b16 %v600
    %v641 = vunpack.c.l.b16 %v601
    %v642 = vunpack.c.l.b16 %v602
    %v643 = vunpack.c.l.b16 %v603
    %v644 = vunpack.c.l.b16 %v604
    %v645 = vunpack.c.l.b16 %v605
    %v646 = vunpack.c.l.b16 %v606
    %v647 = vunpack.c.l.b16 %v607
    %v648 = vunpack.c.l.b16 %v608
    %v649 = vunpack.c.l.b16 %v609
    %v650 = vunpack.c.l.b16 %v610
    %v651 = vunpack.c.l.b16 %v611
    %v652 = vunpack.c.l.b16 %v612
    %v653 = vunpack.c.l.b16 %v613
    %v654 = vunpack.c.l.b16 %v614
    %v655 = vunpack.c.l.b16 %v615
    %v656 = vpack.c.b16 %v641, %v640
    %v657 = vpack.c.b16 %v643, %v642
    %v658 = vpack.c.b16 %v645, %v644
    %v659 = vpack.c.b16 %v647, %v646
    %v660 = vpack.c.b16 %v649, %v648
    %v661 = vpack.c.b16 %v651, %v650
    %v662 = vpack.c.b16 %v653, %v652
    %v663 = vpack.c.b16 %v655, %v654
    %672 = vmatprep.subr.bf16.mxu0 0
    %673 = vmatpush1.bf16.msra.mxu0 %v656
    %674 = vmatprep.subr.bf16.mxu0 0
    %675 = vmatpush1.bf16.msra.mxu0 %v657
    %676 = vmatprep.subr.bf16.mxu0 0
    %677 = vmatpush1.bf16.msra.mxu0 %v658
    %678 = vmatprep.subr.bf16.mxu0 0
    %679 = vmatpush1.bf16.msra.mxu0 %v659
    %680 = vmatprep.subr.bf16.mxu0 0
    %681 = vmatpush1.bf16.msra.mxu0 %v660
    %682 = vmatprep.subr.bf16.mxu0 0
    %683 = vmatpush1.bf16.msra.mxu0 %v661
    %684 = vmatprep.subr.bf16.mxu0 0
    %685 = vmatpush1.bf16.msra.mxu0 %v662
    %686 = vmatprep.subr.bf16.mxu0 0
    %687 = vmatpush1.bf16.msra.mxu0 %v663
    %688 = vmatprep.subr.bf16.mxu0 0
    %689 = vmatpush1.bf16.msra.mxu0 0
    %690 = vmatprep.subr.bf16.mxu0 0
    %691 = vmatpush1.bf16.msra.mxu0 0
    %692 = vmatprep.subr.bf16.mxu0 0
    %693 = vmatpush1.bf16.msra.mxu0 0
    %694 = vmatprep.subr.bf16.mxu0 0
    %695 = vmatpush1.bf16.msra.mxu0 0
    %696 = vmatprep.subr.bf16.mxu0 0
    %697 = vmatpush1.bf16.msra.mxu0 0
    %698 = vmatprep.subr.bf16.mxu0 0
    %699 = vmatpush1.bf16.msra.mxu0 0
    %700 = vmatprep.subr.bf16.mxu0 0
    %701 = vmatpush1.bf16.msra.mxu0 0
    %702 = vmatprep.subr.bf16.mxu0 0
    %703 = vmatpush1.bf16.msra.mxu0 0
    %704 = vmatprep.mubr.bf16.mxu0 0
    %705 = vmatmul.mubr.bf16.gmra.mrb[0].mxu0 %v617
    %v706 = vpop.f32.mrb[0].mxu0
    %v707 = vadd.f32 %v622, %v706
    %v708 = vpop.f32.mrb[0].mxu0
    %v709 = vpop.f32.mrb[0].mxu0
    %v710 = vadd.f32 %v622, %v709
    %v711 = vpop.f32.mrb[0].mxu0
    %712 = vdwg.mxu0
    %v713 = vld [vmem:[#allocation11] sm:$0xf]
    %v714 = vld [vmem:[#allocation11 + $0x4] sm:$0xf]
    %v715 = vld [vmem:[#allocation11 + $0x8] sm:$0xf]
    %v716 = vld [vmem:[#allocation11 + $0xc] sm:$0xf]
    %v717 = vld [vmem:[#allocation11 + $0x10] sm:$0xf]
    %v718 = vld [vmem:[#allocation11 + $0x14] sm:$0xf]
    %v719 = vld [vmem:[#allocation11 + $0x18] sm:$0xf]
    %v720 = vld [vmem:[#allocation11 + $0x1c] sm:$0xf]
    %v721 = vld [vmem:[#allocation11 + $0x20] sm:$0xf]
    %v722 = vld [vmem:[#allocation11 + $0x24] sm:$0xf]
    %v723 = vld [vmem:[#allocation11 + $0x28] sm:$0xf]
    %v724 = vld [vmem:[#allocation11 + $0x2c] sm:$0xf]
    %v725 = vld [vmem:[#allocation11 + $0x30] sm:$0xf]
    %v726 = vld [vmem:[#allocation11 + $0x34] sm:$0xf]
    %v727 = vld [vmem:[#allocation11 + $0x38] sm:$0xf]
    %v728 = vld [vmem:[#allocation11 + $0x3c] sm:$0xf]
    %v729 = vld [vmem:[%s10] sm:$0x1]
    %v730 = vpack.c.bf16 %v710, %v707
    %v732 = vlaneseq
    %v733 = vshrl.u32 %v732, 7
    %v734 = vsub.s32 0, %v733
    %v735 = vrot.slane %v729, %v734
    %v753 = vunpack.c.l.b16 %v713
    %v754 = vunpack.c.l.b16 %v714
    %v755 = vunpack.c.l.b16 %v715
    %v756 = vunpack.c.l.b16 %v716
    %v757 = vunpack.c.l.b16 %v717
    %v758 = vunpack.c.l.b16 %v718
    %v759 = vunpack.c.l.b16 %v719
    %v760 = vunpack.c.l.b16 %v720
    %v761 = vunpack.c.l.b16 %v721
    %v762 = vunpack.c.l.b16 %v722
    %v763 = vunpack.c.l.b16 %v723
    %v764 = vunpack.c.l.b16 %v724
    %v765 = vunpack.c.l.b16 %v725
    %v766 = vunpack.c.l.b16 %v726
    %v767 = vunpack.c.l.b16 %v727
    %v768 = vunpack.c.l.b16 %v728
    %v769 = vpack.c.b16 %v754, %v753
    %v770 = vpack.c.b16 %v756, %v755
    %v771 = vpack.c.b16 %v758, %v757
    %v772 = vpack.c.b16 %v760, %v759
    %v773 = vpack.c.b16 %v762, %v761
    %v774 = vpack.c.b16 %v764, %v763
    %v775 = vpack.c.b16 %v766, %v765
    %v776 = vpack.c.b16 %v768, %v767
    %785 = vmatprep.subr.bf16.mxu0 0
    %786 = vmatpush1.bf16.msra.mxu0 %v769
    %787 = vmatprep.subr.bf16.mxu0 0
    %788 = vmatpush1.bf16.msra.mxu0 %v770
    %789 = vmatprep.subr.bf16.mxu0 0
    %790 = vmatpush1.bf16.msra.mxu0 %v771
    %791 = vmatprep.subr.bf16.mxu0 0
    %792 = vmatpush1.bf16.msra.mxu0 %v772
    %793 = vmatprep.subr.bf16.mxu0 0
    %794 = vmatpush1.bf16.msra.mxu0 %v773
    %795 = vmatprep.subr.bf16.mxu0 0
    %796 = vmatpush1.bf16.msra.mxu0 %v774
    %797 = vmatprep.subr.bf16.mxu0 0
    %798 = vmatpush1.bf16.msra.mxu0 %v775
    %799 = vmatprep.subr.bf16.mxu0 0
    %800 = vmatpush1.bf16.msra.mxu0 %v776
    %801 = vmatprep.subr.bf16.mxu0 0
    %802 = vmatpush1.bf16.msra.mxu0 0
    %803 = vmatprep.subr.bf16.mxu0 0
    %804 = vmatpush1.bf16.msra.mxu0 0
    %805 = vmatprep.subr.bf16.mxu0 0
    %806 = vmatpush1.bf16.msra.mxu0 0
    %807 = vmatprep.subr.bf16.mxu0 0
    %808 = vmatpush1.bf16.msra.mxu0 0
    %809 = vmatprep.subr.bf16.mxu0 0
    %810 = vmatpush1.bf16.msra.mxu0 0
    %811 = vmatprep.subr.bf16.mxu0 0
    %812 = vmatpush1.bf16.msra.mxu0 0
    %813 = vmatprep.subr.bf16.mxu0 0
    %814 = vmatpush1.bf16.msra.mxu0 0
    %815 = vmatprep.subr.bf16.mxu0 0
    %816 = vmatpush1.bf16.msra.mxu0 0
    %817 = vmatprep.mubr.bf16.mxu0 0
    %818 = vmatmul.mubr.bf16.gmra.mrb[0].mxu0 %v730
    %v819 = vpop.f32.mrb[0].mxu0
    %v820 = vadd.f32 %v735, %v819
    %v821 = vpop.f32.mrb[0].mxu0
    %v822 = vpop.f32.mrb[0].mxu0
    %v823 = vadd.f32 %v735, %v822
    %v824 = vpop.f32.mrb[0].mxu0
    %825 = vdwg.mxu0
    %v826 = vmax.f32 %v820, 0.0
    %v827 = vmax.f32 %v823, 0.0
    %v828 = vld [vmem:[#allocation13] sm:$0xf]
    %v829 = vld [vmem:[#allocation13 + $0x4] sm:$0xf]
    %v830 = vld [vmem:[#allocation13 + $0x8] sm:$0xf]
    %v831 = vld [vmem:[#allocation13 + $0xc] sm:$0xf]
    %v832 = vld [vmem:[#allocation13 + $0x10] sm:$0xf]
    %v833 = vld [vmem:[#allocation13 + $0x14] sm:$0xf]
    %v834 = vld [vmem:[#allocation13 + $0x18] sm:$0xf]
    %v835 = vld [vmem:[#allocation13 + $0x1c] sm:$0xf]
    %v836 = vld [vmem:[#allocation13 + $0x20] sm:$0xf]
    %v837 = vld [vmem:[#allocation13 + $0x24] sm:$0xf]
    %v838 = vld [vmem:[#allocation13 + $0x28] sm:$0xf]
    %v839 = vld [vmem:[#allocation13 + $0x2c] sm:$0xf]
    %v840 = vld [vmem:[#allocation13 + $0x30] sm:$0xf]
    %v841 = vld [vmem:[#allocation13 + $0x34] sm:$0xf]
    %v842 = vld [vmem:[#allocation13 + $0x38] sm:$0xf]
    %v843 = vld [vmem:[#allocation13 + $0x3c] sm:$0xf]
    %v844 = vld [vmem:[%s12] sm:$0x1]
    %v845 = vpack.c.bf16 %v827, %v826
    %v847 = vlaneseq
    %v848 = vshrl.u32 %v847, 7
    %v849 = vsub.s32 0, %v848
    %v850 = vrot.slane %v844, %v849
    %v868 = vunpack.c.l.b16 %v828
    %v869 = vunpack.c.l.b16 %v829
    %v870 = vunpack.c.l.b16 %v830
    %v871 = vunpack.c.l.b16 %v831
    %v872 = vunpack.c.l.b16 %v832
    %v873 = vunpack.c.l.b16 %v833
    %v874 = vunpack.c.l.b16 %v834
    %v875 = vunpack.c.l.b16 %v835
    %v876 = vunpack.c.l.b16 %v836
    %v877 = vunpack.c.l.b16 %v837
    %v878 = vunpack.c.l.b16 %v838
    %v879 = vunpack.c.l.b16 %v839
    %v880 = vunpack.c.l.b16 %v840
    %v881 = vunpack.c.l.b16 %v841
    %v882 = vunpack.c.l.b16 %v842
    %v883 = vunpack.c.l.b16 %v843
    %v884 = vpack.c.b16 %v869, %v868
    %v885 = vpack.c.b16 %v871, %v870
    %v886 = vpack.c.b16 %v873, %v872
    %v887 = vpack.c.b16 %v875, %v874
    %v888 = vpack.c.b16 %v877, %v876
    %v889 = vpack.c.b16 %v879, %v878
    %v890 = vpack.c.b16 %v881, %v880
    %v891 = vpack.c.b16 %v883, %v882
    %900 = vmatprep.subr.bf16.mxu0 0
    %901 = vmatpush1.bf16.msra.mxu0 %v884
    %902 = vmatprep.subr.bf16.mxu0 0
    %903 = vmatpush1.bf16.msra.mxu0 %v885
    %904 = vmatprep.subr.bf16.mxu0 0
    %905 = vmatpush1.bf16.msra.mxu0 %v886
    %906 = vmatprep.subr.bf16.mxu0 0
    %907 = vmatpush1.bf16.msra.mxu0 %v887
    %908 = vmatprep.subr.bf16.mxu0 0
    %909 = vmatpush1.bf16.msra.mxu0 %v888
    %910 = vmatprep.subr.bf16.mxu0 0
    %911 = vmatpush1.bf16.msra.mxu0 %v889
    %912 = vmatprep.subr.bf16.mxu0 0
    %913 = vmatpush1.bf16.msra.mxu0 %v890
    %914 = vmatprep.subr.bf16.mxu0 0
    %915 = vmatpush1.bf16.msra.mxu0 %v891
    %916 = vmatprep.subr.bf16.mxu0 0
    %917 = vmatpush1.bf16.msra.mxu0 0
    %918 = vmatprep.subr.bf16.mxu0 0
    %919 = vmatpush1.bf16.msra.mxu0 0
    %920 = vmatprep.subr.bf16.mxu0 0
    %921 = vmatpush1.bf16.msra.mxu0 0
    %922 = vmatprep.subr.bf16.mxu0 0
    %923 = vmatpush1.bf16.msra.mxu0 0
    %924 = vmatprep.subr.bf16.mxu0 0
    %925 = vmatpush1.bf16.msra.mxu0 0
    %926 = vmatprep.subr.bf16.mxu0 0
    %927 = vmatpush1.bf16.msra.mxu0 0
    %928 = vmatprep.subr.bf16.mxu0 0
    %929 = vmatpush1.bf16.msra.mxu0 0
    %930 = vmatprep.subr.bf16.mxu0 0
    %931 = vmatpush1.bf16.msra.mxu0 0
    %932 = vmatprep.mubr.bf16.mxu0 0
    %933 = vmatmul.mubr.bf16.gmra.mrb[0].mxu0 %v845
    %v934 = vpop.f32.mrb[0].mxu0
    %v935 = vadd.f32 %v850, %v934
    %v936 = vpop.f32.mrb[0].mxu0
    %v937 = vpop.f32.mrb[0].mxu0
    %v938 = vadd.f32 %v850, %v937
    %v939 = vpop.f32.mrb[0].mxu0
    %940 = vdwg.mxu0
    %v941 = vmax.f32 %v935, 0.0
    %v942 = vmax.f32 %v938, 0.0
    %v943 = vld [vmem:[#allocation14] sm:$0xf]
    %v944 = vld [vmem:[#allocation14 + $0x4] sm:$0xf]
    %v945 = vld [vmem:[#allocation14 + $0x8] sm:$0xf]
    %v946 = vld [vmem:[#allocation14 + $0xc] sm:$0xf]
    %v947 = vld [vmem:[#allocation14 + $0x10] sm:$0xf]
    %v948 = vld [vmem:[#allocation14 + $0x14] sm:$0xf]
    %v949 = vld [vmem:[#allocation14 + $0x18] sm:$0xf]
    %v950 = vld [vmem:[#allocation14 + $0x1c] sm:$0xf]
    %v951 = vld [vmem:[#allocation14 + $0x20] sm:$0xf]
    %v952 = vld [vmem:[#allocation14 + $0x24] sm:$0xf]
    %v953 = vld [vmem:[#allocation14 + $0x28] sm:$0xf]
    %v954 = vld [vmem:[#allocation14 + $0x2c] sm:$0xf]
    %v955 = vld [vmem:[#allocation14 + $0x30] sm:$0xf]
    %v956 = vld [vmem:[#allocation14 + $0x34] sm:$0xf]
    %v957 = vld [vmem:[#allocation14 + $0x38] sm:$0xf]
    %v958 = vld [vmem:[#allocation14 + $0x3c] sm:$0xf]
    %v959 = vld [vmem:[%s14] sm:$0x1]
    %v960 = vpack.c.bf16 %v942, %v941
    %v962 = vlaneseq
    %v963 = vshrl.u32 %v962, 7
    %v964 = vsub.s32 0, %v963
    %v965 = vrot.slane %v959, %v964
    %v983 = vunpack.c.l.b16 %v943
    %v984 = vunpack.c.l.b16 %v944
    %v985 = vunpack.c.l.b16 %v945
    %v986 = vunpack.c.l.b16 %v946
    %v987 = vunpack.c.l.b16 %v947
    %v988 = vunpack.c.l.b16 %v948
    %v989 = vunpack.c.l.b16 %v949
    %v990 = vunpack.c.l.b16 %v950
    %v991 = vunpack.c.l.b16 %v951
    %v992 = vunpack.c.l.b16 %v952
    %v993 = vunpack.c.l.b16 %v953
    %v994 = vunpack.c.l.b16 %v954
    %v995 = vunpack.c.l.b16 %v955
    %v996 = vunpack.c.l.b16 %v956
    %v997 = vunpack.c.l.b16 %v957
    %v998 = vunpack.c.l.b16 %v958
    %v999 = vpack.c.b16 %v984, %v983
    %v1000 = vpack.c.b16 %v986, %v985
    %v1001 = vpack.c.b16 %v988, %v987
    %v1002 = vpack.c.b16 %v990, %v989
    %v1003 = vpack.c.b16 %v992, %v991
    %v1004 = vpack.c.b16 %v994, %v993
    %v1005 = vpack.c.b16 %v996, %v995
    %v1006 = vpack.c.b16 %v998, %v997
    %1015 = vmatprep.subr.bf16.mxu0 0
    %1016 = vmatpush1.bf16.msra.mxu0 %v999
    %1017 = vmatprep.subr.bf16.mxu0 0
    %1018 = vmatpush1.bf16.msra.mxu0 %v1000
    %1019 = vmatprep.subr.bf16.mxu0 0
    %1020 = vmatpush1.bf16.msra.mxu0 %v1001
    %1021 = vmatprep.subr.bf16.mxu0 0
    %1022 = vmatpush1.bf16.msra.mxu0 %v1002
    %1023 = vmatprep.subr.bf16.mxu0 0
    %1024 = vmatpush1.bf16.msra.mxu0 %v1003
    %1025 = vmatprep.subr.bf16.mxu0 0
    %1026 = vmatpush1.bf16.msra.mxu0 %v1004
    %1027 = vmatprep.subr.bf16.mxu0 0
    %1028 = vmatpush1.bf16.msra.mxu0 %v1005
    %1029 = vmatprep.subr.bf16.mxu0 0
    %1030 = vmatpush1.bf16.msra.mxu0 %v1006
    %1031 = vmatprep.subr.bf16.mxu0 0
    %1032 = vmatpush1.bf16.msra.mxu0 0
    %1033 = vmatprep.subr.bf16.mxu0 0
    %1034 = vmatpush1.bf16.msra.mxu0 0
    %1035 = vmatprep.subr.bf16.mxu0 0
    %1036 = vmatpush1.bf16.msra.mxu0 0
    %1037 = vmatprep.subr.bf16.mxu0 0
    %1038 = vmatpush1.bf16.msra.mxu0 0
    %1039 = vmatprep.subr.bf16.mxu0 0
    %1040 = vmatpush1.bf16.msra.mxu0 0
    %1041 = vmatprep.subr.bf16.mxu0 0
    %1042 = vmatpush1.bf16.msra.mxu0 0
    %1043 = vmatprep.subr.bf16.mxu0 0
    %1044 = vmatpush1.bf16.msra.mxu0 0
    %1045 = vmatprep.subr.bf16.mxu0 0
    %1046 = vmatpush1.bf16.msra.mxu0 0
    %1047 = vmatprep.mubr.bf16.mxu0 0
    %1048 = vmatmul.mubr.bf16.gmra.mrb[0].mxu0 %v960
    %v1049 = vpop.f32.mrb[0].mxu0
    %v1050 = vadd.f32 %v965, %v1049
    %v1051 = vpop.f32.mrb[0].mxu0
    %v1052 = vpop.f32.mrb[0].mxu0
    %v1053 = vadd.f32 %v965, %v1052
    %v1054 = vpop.f32.mrb[0].mxu0
    %1055 = vdwg.mxu0
    %v1056 = vmax.f32 %v1050, 0.0
    %v1057 = vmax.f32 %v1053, 0.0
    %v1058 = vld [vmem:[#allocation16] sm:$0xff]
    %v1059 = vld [vmem:[#allocation16 + $0x8] sm:$0xff]
    %v1060 = vld [vmem:[#allocation16 + $0x10] sm:$0xff]
    %v1061 = vld [vmem:[#allocation16 + $0x18] sm:$0xff]
    %v1062 = vld [vmem:[#allocation16 + $0x20] sm:$0xff]
    %v1063 = vld [vmem:[#allocation16 + $0x28] sm:$0xff]
    %v1064 = vld [vmem:[#allocation16 + $0x30] sm:$0xff]
    %v1065 = vld [vmem:[#allocation16 + $0x38] sm:$0xff]
    %v1066 = vld [vmem:[#allocation16 + $0x40] sm:$0xff]
    %v1067 = vld [vmem:[#allocation16 + $0x48] sm:$0xff]
    %v1068 = vld [vmem:[#allocation16 + $0x50] sm:$0xff]
    %v1069 = vld [vmem:[#allocation16 + $0x58] sm:$0xff]
    %v1070 = vld [vmem:[#allocation16 + $0x60] sm:$0xff]
    %v1071 = vld [vmem:[#allocation16 + $0x68] sm:$0xff]
    %v1072 = vld [vmem:[#allocation16 + $0x70] sm:$0xff]
    %v1073 = vld [vmem:[#allocation16 + $0x78] sm:$0xff]
    %v1074 = vld [vmem:[%s16] sm:$0x3]
    %v1075 = vpack.c.bf16 %v1057, %v1056
    %v1077 = vlaneseq
    %v1078 = vshrl.u32 %v1077, 7
    %v1079 = vsub.s32 0, %v1078
    %v1080 = vrot.slane %v1074, %v1079
    %v1081 = vlaneseq
    %v1082 = vshrl.u32 %v1081, 7
    %v1083 = vsub.s32 1, %v1082
    %v1084 = vrot.slane %v1074, %v1083
    %v1103 = vunpack.c.l.b16 %v1058
    %v1104 = vunpack.c.h.b16 %v1058
    %v1105 = vunpack.c.l.b16 %v1059
    %v1106 = vunpack.c.h.b16 %v1059
    %v1107 = vunpack.c.l.b16 %v1060
    %v1108 = vunpack.c.h.b16 %v1060
    %v1109 = vunpack.c.l.b16 %v1061
    %v1110 = vunpack.c.h.b16 %v1061
    %v1111 = vunpack.c.l.b16 %v1062
    %v1112 = vunpack.c.h.b16 %v1062
    %v1113 = vunpack.c.l.b16 %v1063
    %v1114 = vunpack.c.h.b16 %v1063
    %v1115 = vunpack.c.l.b16 %v1064
    %v1116 = vunpack.c.h.b16 %v1064
    %v1117 = vunpack.c.l.b16 %v1065
    %v1118 = vunpack.c.h.b16 %v1065
    %v1119 = vunpack.c.l.b16 %v1066
    %v1120 = vunpack.c.h.b16 %v1066
    %v1121 = vunpack.c.l.b16 %v1067
    %v1122 = vunpack.c.h.b16 %v1067
    %v1123 = vunpack.c.l.b16 %v1068
    %v1124 = vunpack.c.h.b16 %v1068
    %v1125 = vunpack.c.l.b16 %v1069
    %v1126 = vunpack.c.h.b16 %v1069
    %v1127 = vunpack.c.l.b16 %v1070
    %v1128 = vunpack.c.h.b16 %v1070
    %v1129 = vunpack.c.l.b16 %v1071
    %v1130 = vunpack.c.h.b16 %v1071
    %v1131 = vunpack.c.l.b16 %v1072
    %v1132 = vunpack.c.h.b16 %v1072
    %v1133 = vunpack.c.l.b16 %v1073
    %v1134 = vunpack.c.h.b16 %v1073
    %v1135 = vpack.c.b16 %v1105, %v1103
    %v1136 = vpack.c.b16 %v1106, %v1104
    %v1137 = vpack.c.b16 %v1109, %v1107
    %v1138 = vpack.c.b16 %v1110, %v1108
    %v1139 = vpack.c.b16 %v1113, %v1111
    %v1140 = vpack.c.b16 %v1114, %v1112
    %v1141 = vpack.c.b16 %v1117, %v1115
    %v1142 = vpack.c.b16 %v1118, %v1116
    %v1143 = vpack.c.b16 %v1121, %v1119
    %v1144 = vpack.c.b16 %v1122, %v1120
    %v1145 = vpack.c.b16 %v1125, %v1123
    %v1146 = vpack.c.b16 %v1126, %v1124
    %v1147 = vpack.c.b16 %v1129, %v1127
    %v1148 = vpack.c.b16 %v1130, %v1128
    %v1149 = vpack.c.b16 %v1133, %v1131
    %v1150 = vpack.c.b16 %v1134, %v1132
    %1167 = vmatprep.subr.bf16.mxu0 %v1136
    %1168 = vmatpush1.bf16.msra.mxu0 %v1135
    %1169 = vmatprep.subr.bf16.mxu0 %v1138
    %1170 = vmatpush1.bf16.msra.mxu0 %v1137
    %1171 = vmatprep.subr.bf16.mxu0 %v1140
    %1172 = vmatpush1.bf16.msra.mxu0 %v1139
    %1173 = vmatprep.subr.bf16.mxu0 %v1142
    %1174 = vmatpush1.bf16.msra.mxu0 %v1141
    %1175 = vmatprep.subr.bf16.mxu0 %v1144
    %1176 = vmatpush1.bf16.msra.mxu0 %v1143
    %1177 = vmatprep.subr.bf16.mxu0 %v1146
    %1178 = vmatpush1.bf16.msra.mxu0 %v1145
    %1179 = vmatprep.subr.bf16.mxu0 %v1148
    %1180 = vmatpush1.bf16.msra.mxu0 %v1147
    %1181 = vmatprep.subr.bf16.mxu0 %v1150
    %1182 = vmatpush1.bf16.msra.mxu0 %v1149
    %1183 = vmatprep.subr.bf16.mxu0 0
    %1184 = vmatpush1.bf16.msra.mxu0 0
    %1185 = vmatprep.subr.bf16.mxu0 0
    %1186 = vmatpush1.bf16.msra.mxu0 0
    %1187 = vmatprep.subr.bf16.mxu0 0
    %1188 = vmatpush1.bf16.msra.mxu0 0
    %1189 = vmatprep.subr.bf16.mxu0 0
    %1190 = vmatpush1.bf16.msra.mxu0 0
    %1191 = vmatprep.subr.bf16.mxu0 0
    %1192 = vmatpush1.bf16.msra.mxu0 0
    %1193 = vmatprep.subr.bf16.mxu0 0
    %1194 = vmatpush1.bf16.msra.mxu0 0
    %1195 = vmatprep.subr.bf16.mxu0 0
    %1196 = vmatpush1.bf16.msra.mxu0 0
    %1197 = vmatprep.subr.bf16.mxu0 0
    %1198 = vmatpush1.bf16.msra.mxu0 0
    %1199 = vmatprep.mubr.bf16.mxu0 0
    %1200 = vmatmul.mubr.bf16.gmra.mrb[0].mxu0 %v1075
    %v1201 = vpop.f32.mrb[0].mxu0
    %v1202 = vadd.f32 %v1080, %v1201
    %v1203 = vpop.f32.mrb[0].mxu0
    %v1204 = vadd.f32 %v1084, %v1203
    %v1205 = vpop.f32.mrb[0].mxu0
    %v1206 = vadd.f32 %v1080, %v1205
    %v1207 = vpop.f32.mrb[0].mxu0
    %v1208 = vadd.f32 %v1084, %v1207
    %1209 = vdwg.mxu0
    %1210 = vst [vmem:[#allocation17] sm:$0xff] %v1202
    %1211 = vst [vmem:[#allocation17 + $0x8] sm:$0xff] %v1204
    %1212 = vst [vmem:[#allocation17 + $0x10] sm:$0xff] %v1206
    %1213 = vst [vmem:[#allocation17 + $0x18] sm:$0xff] %v1208
    // Predicated region
    $region106: #{_autoencoder_padded.1} parent=1 // pred_check
      _
    $region107: #{_autoencoder_padded.1} parent=1 // pred_check_branch
      %1215 = sbr.rel (0) target = $region109
    $region108: #{_autoencoder_padded.1} parent=1 // pred_region
      %s1217 = ssub.s32 512, 512
      %1218 = vsyncadd [#allocation4], %s1217
      %s1219 = sshll.u32 [#allocation17], 4
      %s1220 = int_to_ptr.vmem [resolvable:$true] %s1219
      %1225 = dma.vmem_to_hbm [thread:$0]  %s1220, 512, %s17, [#allocation4], 256, 256, 16
    $region109: #{_autoencoder_padded.1} parent=1 // pred_fallthru
      _
    // Predicated region
    $region110: #{_autoencoder_padded.1} parent=1 // pred_check
      _
    $region111: #{_autoencoder_padded.1} parent=1 // pred_check_branch
      %1227 = sbr.rel (0) target = $region113
    $region112: #{_autoencoder_padded.1} parent=1 // pred_region
      %1228 = dma.done [#allocation4], 512
    $region113: #{_autoencoder_padded.1} parent=1 // pred_fallthru
      _
    %1229 = vsyncpa [#allocation3], 1
    %1230 = vsyncpa [#allocation6], 1
    %1231 = vsyncpa [#allocation9], 1
    %1232 = vsyncpa [#allocation12], 1
    %1233 = vsyncpa [#allocation15], 1
    %1234 = vsyncpa [#allocation4], 1

</llo_original>
